<compile_context>
chip_gen: v5e
topology: v5e:2x2
jax: 0.10.0
libtpu: 0.0.40
codegen_flags: <defaults>
</compile_context>

<pallas_src>
import functools

import jax
import jax.numpy as jnp
from jax.experimental import pallas as pl
from jax.experimental.pallas import tpu as pltpu


def _mlp_kernel(x_ref, w1_ref, b1_ref, w2_ref, b2_ref, w3_ref, out_ref):
    """Fused 3-layer MLP in batch-on-lanes layout.

    x_ref : (in_dim, TB)      bf16
    w1_ref: (hidden, in_dim)  bf16   (PyTorch (out,in) layout)
    b1_ref: (hidden, 1)       f32
    w2_ref: (hidden, hidden)  bf16
    b2_ref: (hidden, 1)       f32
    w3_ref: (hidden, out_dim) f32
    out_ref: (out_dim, TB)    f32
    """
    # Layer 1: bf16 MXU matmul, f32 accumulate, f32 bias + tanh.
    h1 = jnp.tanh(
        jnp.dot(w1_ref[...], x_ref[...], preferred_element_type=jnp.float32)
        + b1_ref[...]
    )
    # Layer 2.
    h2 = jnp.tanh(
        jnp.dot(w2_ref[...], h1.astype(w2_ref.dtype),
                preferred_element_type=jnp.float32)
        + b2_ref[...]
    )
    # Layer 3 (no bias).  For out_dim == 1 a VPU multiply + sublane reduction is
    # cheaper than a 1-row MXU matmul and keeps the MXU free for the real work.
    w3 = w3_ref[...]
    if w3.shape[1] == 1:
        out_ref[...] = jnp.sum(h2 * w3, axis=0, keepdims=True)
    else:
        out_ref[...] = jax.lax.dot_general(
            w3, h2, (((0,), (0,)), ((), ())),
            preferred_element_type=jnp.float32)


@functools.partial(jax.jit, static_argnames=("block_b",))
def tdksnn_forward(x, w1, b1, w2, b2, w3, *, block_b=512):
    """Pallas TPU implementation of TDKSNN.forward.

    x : (B, input_dim) float32
    w1: (hidden, input_dim)  (PyTorch layout);  b1: (hidden,)
    w2: (hidden, hidden);                       b2: (hidden,)
    w3: (output_dim, hidden)                    (no bias)
    returns (B, output_dim) float32
    """
    B, in_dim = x.shape
    hidden = w1.shape[0]
    out_dim = w3.shape[0]

    # Batch tile: multiple of the 128-lane width; small enough to stay well
    # under v7x's 64 MiB VMEM even with double-buffered input/output tiles.
    lane = 128
    block_b = max(lane, (block_b // lane) * lane)
    tb = max(lane, min(block_b, pl.cdiv(B, lane) * lane))
    bp = pl.cdiv(B, tb) * tb

    # Transposed, lane-dense layout; bf16 matmul operands halve the DMA bytes.
    xt = jnp.zeros((in_dim, bp), jnp.bfloat16).at[:, :B].set(
        x.T.astype(jnp.bfloat16))
    w1b = w1.astype(jnp.bfloat16)                    # (hidden, in_dim)
    w2b = w2.astype(jnp.bfloat16)                    # (hidden, hidden)
    b1c = b1.reshape(hidden, 1).astype(jnp.float32)  # broadcast over lanes
    b2c = b2.reshape(hidden, 1).astype(jnp.float32)
    w3c = w3.T.astype(jnp.float32)                   # (hidden, out_dim)

    const = lambda shape: pl.BlockSpec(shape, lambda i: (0, 0))

    out_t = pl.pallas_call(
        _mlp_kernel,
        out_shape=jax.ShapeDtypeStruct((out_dim, bp), jnp.float32),
        grid_spec=pltpu.PrefetchScalarGridSpec(
            num_scalar_prefetch=0,
            grid=(bp // tb,),
            in_specs=[
                pl.BlockSpec((in_dim, tb), lambda i: (0, i)),  # batch-tiled x
                const(w1b.shape),   # weights/biases: resident across grid steps
                const(b1c.shape),
                const(w2b.shape),
                const(b2c.shape),
                const(w3c.shape),
            ],
            out_specs=pl.BlockSpec((out_dim, tb), lambda i: (0, i)),
        ),
        compiler_params=pltpu.CompilerParams(
            dimension_semantics=("parallel",)),   # megacore sharding on v7x
    )(xt, w1b, b1c, w2b, b2c, w3c)

    return out_t[:, :B].T


def orthogonal_init(key, out_features, in_features):
    """Deterministic orthogonal init (mimics torch.nn.init.orthogonal_)."""
    rows, cols = out_features, in_features
    a = jax.random.normal(key, (max(rows, cols), min(rows, cols)), jnp.float32)
    q, r = jnp.linalg.qr(a)
    sign = jnp.sign(jnp.diagonal(r))
    sign = jnp.where(sign == 0, 1.0, sign)   # guard against zero diagonal
    q = q * sign
    if rows < cols:
        q = q.T
    return q[:rows, :cols]


def make_params(input_dim, hidden_dim, output_dim=1):
    """Parameters in PyTorch layout: weights (out, in), biases (out,)."""
    k = jax.random.PRNGKey(0)
    k1, k2, k3, kb1, kb2 = jax.random.split(k, 5)
    w1 = orthogonal_init(k1, hidden_dim, input_dim)       # (hidden, in)
    w2 = orthogonal_init(k2, hidden_dim, hidden_dim)      # (hidden, hidden)
    w3 = orthogonal_init(k3, output_dim, hidden_dim)      # (out, hidden)
    # PyTorch default bias init: U(-1/sqrt(fan_in), 1/sqrt(fan_in)).
    b1 = jax.random.uniform(
        kb1, (hidden_dim,), jnp.float32,
        minval=-1.0 / jnp.sqrt(input_dim), maxval=1.0 / jnp.sqrt(input_dim))
    b2 = jax.random.uniform(
        kb2, (hidden_dim,), jnp.float32,
        minval=-1.0 / jnp.sqrt(hidden_dim), maxval=1.0 / jnp.sqrt(hidden_dim))
    return w1, b1, w2, b2, w3


# TODO(synk): time_derivative / hamiltonian_time_derivative need dH/dx;
# pallas_call has no reverse-mode autodiff rule, so the symplectic gradient
# path requires wrapping this forward in jax.custom_vjp with an explicit
# (ideally fused forward+backward) Pallas kernel rather than jax.grad directly.


if __name__ == "__main__":
    input_dim = 4       # phase-space dimension (q, p)
    hidden_dim = 32
    output_dim = 1
    batch = 8

    w1, b1, w2, b2, w3 = make_params(input_dim, hidden_dim, output_dim)

    kx = jax.random.PRNGKey(0)
    x = jax.random.normal(kx, (batch, input_dim), jnp.float32)

    out = tdksnn_forward(x, w1, b1, w2, b2, w3)
    jax.block_until_ready(out)
    assert out.shape == (batch, output_dim)

    # Tight check vs a reference that emulates the kernel's bf16 matmul inputs
    # (f32 accumulation).
    bf = lambda a: a.astype(jnp.bfloat16).astype(jnp.float32)
    h1 = jnp.tanh(bf(x) @ bf(w1).T + b1)
    h2 = jnp.tanh(bf(h1) @ bf(w2).T + b2)
    ref_bf16 = h2 @ w3.T
    assert jnp.allclose(out, ref_bf16, atol=1e-3, rtol=1e-3), \
        "mismatch vs bf16-emulated reference"

    # Looser check vs the full-f32 PyTorch-equivalent forward semantics.
    h1f = jnp.tanh(x @ w1.T + b1)
    h2f = jnp.tanh(h1f @ w2.T + b2)
    ref_f32 = h2f @ w3.T
    assert jnp.allclose(out, ref_f32, atol=5e-2, rtol=5e-2), \
        "mismatch vs f32 reference"

    print("KERNEL_OK")
</pallas_src>

<mosaic_0001>
module attributes {stable_mosaic.version = 11 : i64} {
  func.func @_mlp_kernel(%arg0: i32, %arg1: memref<4x128xbf16, #tpu.memory_space<vmem>>, %arg2: memref<32x4xbf16, #tpu.memory_space<vmem>>, %arg3: memref<32x1xf32, #tpu.memory_space<vmem>>, %arg4: memref<32x32xbf16, #tpu.memory_space<vmem>>, %arg5: memref<32x1xf32, #tpu.memory_space<vmem>>, %arg6: memref<32x1xf32, #tpu.memory_space<vmem>>, %arg7: memref<1x128xf32, #tpu.memory_space<vmem>>) attributes {dimension_semantics = [#tpu.dimension_semantics<parallel>], iteration_bounds = array<i64: 1>, scalar_prefetch = 0 : i64, scratch_operands = 0 : i64, tpu.core_type = #tpu.core_type<tc>, window_params = [{transform_indices = @transform_0, window_bounds = array<i64: 4, 128>}, {pipeline_mode = #tpu.pipeline_mode<synchronous>, transform_indices = @transform_1, window_bounds = array<i64: 32, 4>}, {pipeline_mode = #tpu.pipeline_mode<synchronous>, transform_indices = @transform_2, window_bounds = array<i64: 32, 1>}, {pipeline_mode = #tpu.pipeline_mode<synchronous>, transform_indices = @transform_3, window_bounds = array<i64: 32, 32>}, {pipeline_mode = #tpu.pipeline_mode<synchronous>, transform_indices = @transform_4, window_bounds = array<i64: 32, 1>}, {pipeline_mode = #tpu.pipeline_mode<synchronous>, transform_indices = @transform_5, window_bounds = array<i64: 32, 1>}, {transform_indices = @transform_6, window_bounds = array<i64: 1, 128>}]} {
    %c0 = arith.constant 0 : index
    %c0_0 = arith.constant 0 : index
    %0 = vector.load %arg2[%c0, %c0_0] : memref<32x4xbf16, #tpu.memory_space<vmem>>, vector<32x4xbf16>
    %c0_1 = arith.constant 0 : index
    %c0_2 = arith.constant 0 : index
    %1 = vector.load %arg1[%c0_1, %c0_2] : memref<4x128xbf16, #tpu.memory_space<vmem>>, vector<4x128xbf16>
    %cst = arith.constant dense<0.000000e+00> : vector<32x128xf32>
    %2 = tpu.matmul %0, %1, %cst {dimension_numbers = #tpu.dot_dimension_numbers<[1], [0], [0], [1], [0, 0, 1, 1], [], []>} : vector<32x4xbf16>, vector<4x128xbf16>, vector<32x128xf32> -> vector<32x128xf32>
    %c0_3 = arith.constant 0 : index
    %c0_4 = arith.constant 0 : index
    %3 = vector.load %arg3[%c0_3, %c0_4] : memref<32x1xf32, #tpu.memory_space<vmem>>, vector<32x1xf32>
    %4 = vector.broadcast %3 : vector<32x1xf32> to vector<32x128xf32>
    %5 = arith.addf %2, %4 : vector<32x128xf32>
    %6 = math.tanh %5 : vector<32x128xf32>
    %c0_5 = arith.constant 0 : index
    %c0_6 = arith.constant 0 : index
    %7 = vector.load %arg4[%c0_5, %c0_6] : memref<32x32xbf16, #tpu.memory_space<vmem>>, vector<32x32xbf16>
    %8 = arith.truncf %6 : vector<32x128xf32> to vector<32x128xbf16>
    %cst_7 = arith.constant dense<0.000000e+00> : vector<32x128xf32>
    %9 = tpu.matmul %7, %8, %cst_7 {dimension_numbers = #tpu.dot_dimension_numbers<[1], [0], [0], [1], [0, 0, 1, 1], [], []>} : vector<32x32xbf16>, vector<32x128xbf16>, vector<32x128xf32> -> vector<32x128xf32>
    %c0_8 = arith.constant 0 : index
    %c0_9 = arith.constant 0 : index
    %10 = vector.load %arg5[%c0_8, %c0_9] : memref<32x1xf32, #tpu.memory_space<vmem>>, vector<32x1xf32>
    %11 = vector.broadcast %10 : vector<32x1xf32> to vector<32x128xf32>
    %12 = arith.addf %9, %11 : vector<32x128xf32>
    %13 = math.tanh %12 : vector<32x128xf32>
    %c0_10 = arith.constant 0 : index
    %c0_11 = arith.constant 0 : index
    %14 = vector.load %arg6[%c0_10, %c0_11] : memref<32x1xf32, #tpu.memory_space<vmem>>, vector<32x1xf32>
    %15 = vector.broadcast %14 : vector<32x1xf32> to vector<32x128xf32>
    %16 = arith.mulf %13, %15 : vector<32x128xf32>
    %cst_12 = arith.constant dense<0.000000e+00> : vector<128xf32>
    %17 = vector.multi_reduction <add>, %16, %cst_12 [0] : vector<32x128xf32> to vector<128xf32>
    %18 = vector.shape_cast %17 : vector<128xf32> to vector<1x128xf32>
    %c0_13 = arith.constant 0 : index
    %c0_14 = arith.constant 0 : index
    %19 = vector.load %arg7[%c0_13, %c0_14] : memref<1x128xf32, #tpu.memory_space<vmem>>, vector<1x128xf32>
    tpu.vector_store %arg7[%c0_13, %c0_14], %18 {strides = array<i32>} : memref<1x128xf32, #tpu.memory_space<vmem>>, vector<1x128xf32>,
    return
  }
  func.func @transform_0(%arg0: i32) -> (i32, i32) {
    %c0_i32 = arith.constant 0 : i32
    %c0_i32_0 = arith.constant 0 : i32
    return %c0_i32, %arg0 : i32, i32
  }
  func.func @transform_1(%arg0: i32) -> (i32, i32) {
    %c0_i32 = arith.constant 0 : i32
    %c0_i32_0 = arith.constant 0 : i32
    %c0_i32_1 = arith.constant 0 : i32
    return %c0_i32, %c0_i32_0 : i32, i32
  }
  func.func @transform_2(%arg0: i32) -> (i32, i32) {
    %c0_i32 = arith.constant 0 : i32
    %c0_i32_0 = arith.constant 0 : i32
    %c0_i32_1 = arith.constant 0 : i32
    return %c0_i32, %c0_i32_0 : i32, i32
  }
  func.func @transform_3(%arg0: i32) -> (i32, i32) {
    %c0_i32 = arith.constant 0 : i32
    %c0_i32_0 = arith.constant 0 : i32
    %c0_i32_1 = arith.constant 0 : i32
    return %c0_i32, %c0_i32_0 : i32, i32
  }
  func.func @transform_4(%arg0: i32) -> (i32, i32) {
    %c0_i32 = arith.constant 0 : i32
    %c0_i32_0 = arith.constant 0 : i32
    %c0_i32_1 = arith.constant 0 : i32
    return %c0_i32, %c0_i32_0 : i32, i32
  }
  func.func @transform_5(%arg0: i32) -> (i32, i32) {
    %c0_i32 = arith.constant 0 : i32
    %c0_i32_0 = arith.constant 0 : i32
    %c0_i32_1 = arith.constant 0 : i32
    return %c0_i32, %c0_i32_0 : i32, i32
  }
  func.func @transform_6(%arg0: i32) -> (i32, i32) {
    %c0_i32 = arith.constant 0 : i32
    %c0_i32_0 = arith.constant 0 : i32
    return %c0_i32, %arg0 : i32, i32
  }
}

</mosaic_0001>

<llo_original>
// kernel: tdksnn_forward.1
$region0: #{tdksnn_forward.1}
  #allocation0 [shape = 'u32[]', space=smem, size = 0x4, offset = 0x4, fixed_abs, tag = 'smem constant byte address 0x4 - core index']
  #allocation1 [shape = 'u32[72,128]{1,0:T(1,128)}', space=vmem, size = 0x9000, scoped, tag = 'internal scratch']
  %s0 = inlined_call_operand.vmem [shape: bf16[4,128], index: 0, kind: input, shape index: {}]
  %s1 = inlined_call_operand.vmem [shape: bf16[32,4], index: 1, kind: input, shape index: {}]
  %s2 = inlined_call_operand.vmem [shape: f32[32,1], index: 2, kind: input, shape index: {}]
  %s3 = inlined_call_operand.vmem [shape: bf16[32,32], index: 3, kind: input, shape index: {}]
  %s4 = inlined_call_operand.vmem [shape: f32[32,1], index: 4, kind: input, shape index: {}]
  %s5 = inlined_call_operand.vmem [shape: f32[32,1], index: 5, kind: input, shape index: {}]
  %s6 = inlined_call_operand.vmem [shape: f32[1,128], index: 6, kind: output, shape index: {}]
  %s7 = sld [smem:[#allocation0]]
  $region34: #{tdksnn_forward.1} parent=0
    _
  %s9 = ssub.s32 1, %s7
  %s10 = scalar_select 0, %s9, %s7
  // Predicated region
  $region2: #{tdksnn_forward.1} parent=0 // pred_check
    _
  $region3: #{tdksnn_forward.1} parent=0 // pred_check_branch
    %12 = sbr.rel (0) target = $region5
  $region4: #{tdksnn_forward.1} parent=0 // pred_region
    _
  $region5: #{tdksnn_forward.1} parent=0 // pred_fallthru
    _
  // Predicated region
  $region6: #{tdksnn_forward.1} parent=0 // pred_check
    _
  $region7: #{tdksnn_forward.1} parent=0 // pred_check_branch
    %14 = sbr.rel (0) target = $region9
  $region8: #{tdksnn_forward.1} parent=0 // pred_region
    _
  $region9: #{tdksnn_forward.1} parent=0 // pred_fallthru
    _
  // Predicated region
  $region10: #{tdksnn_forward.1} parent=0 // pred_check
    _
  $region11: #{tdksnn_forward.1} parent=0 // pred_check_branch
    %16 = sbr.rel (0) target = $region13
  $region12: #{tdksnn_forward.1} parent=0 // pred_region
    _
  $region13: #{tdksnn_forward.1} parent=0 // pred_fallthru
    _
  // Predicated region
  $region14: #{tdksnn_forward.1} parent=0 // pred_check
    _
  $region15: #{tdksnn_forward.1} parent=0 // pred_check_branch
    %18 = sbr.rel (0) target = $region17
  $region16: #{tdksnn_forward.1} parent=0 // pred_region
    _
  $region17: #{tdksnn_forward.1} parent=0 // pred_fallthru
    _
  // Predicated region
  $region18: #{tdksnn_forward.1} parent=0 // pred_check
    _
  $region19: #{tdksnn_forward.1} parent=0 // pred_check_branch
    %20 = sbr.rel (0) target = $region21
  $region20: #{tdksnn_forward.1} parent=0 // pred_region
    _
  $region21: #{tdksnn_forward.1} parent=0 // pred_fallthru
    _
  // Predicated region
  $region22: #{tdksnn_forward.1} parent=0 // pred_check
    _
  $region23: #{tdksnn_forward.1} parent=0 // pred_check_branch
    %22 = sbr.rel (0) target = $region25
  $region24: #{tdksnn_forward.1} parent=0 // pred_region
    _
  $region25: #{tdksnn_forward.1} parent=0 // pred_fallthru
    _
  %v24 = vld [vmem:[%s1] sm:$0xf]
  %v25 = vld [vmem:[%s1 + $0x4] sm:$0xf]
  %v26 = vld [vmem:[%s1 + $0x8] sm:$0xf]
  %v27 = vld [vmem:[%s1 + $0xc] sm:$0xf]
  %v28 = vld [vmem:[%s0] sm:$0x3]
  %v29 = vld [vmem:[%s2] sm:$0xff]
  %v30 = vld [vmem:[%s2 + $0x8] sm:$0xff]
  %v31 = vld [vmem:[%s2 + $0x10] sm:$0xff]
  %v32 = vld [vmem:[%s2 + $0x18] sm:$0xff]
  %34 = vset.pattern.permute.xlu0 0
  %35 = vperm.xlu0 %34, %v29
  %v36 = vpop.permute.xlu0 %35
  %39 = vset.pattern.permute.xlu0 0
  %40 = vperm.xlu0 %39, %v30
  %v41 = vpop.permute.xlu0 %40
  %44 = vset.pattern.permute.xlu0 0
  %45 = vperm.xlu0 %44, %v31
  %v46 = vpop.permute.xlu0 %45
  %49 = vset.pattern.permute.xlu0 0
  %50 = vperm.xlu0 %49, %v32
  %v51 = vpop.permute.xlu0 %50
  %v57 = vunpack.c.l.b16 %v24
  %v58 = vunpack.c.l.b16 %v25
  %v59 = vunpack.c.l.b16 %v26
  %v60 = vunpack.c.l.b16 %v27
  %v61 = vpack.c.b16 %v58, %v57
  %v62 = vpack.c.b16 %v60, %v59
  %vm63 = vcmask 31744
  %v65 = vsel %vm63, %v61, 0
  %v68 = vsel %vm63, %v62, 0
  %vm70 = vcmask 1041408
  %v72 = vsel %vm70, %v28, 0
  %74 = vmatpush.bf16.msra.mxu0 0
  %75 = vmatpush.bf16.msra.mxu0 0
  %76 = vmatpush.bf16.msra.mxu0 0
  %77 = vmatpush.bf16.msra.mxu0 0
  %78 = vmatpush.bf16.msra.mxu0 0
  %79 = vmatpush.bf16.msra.mxu0 0
  %80 = vmatpush.bf16.msra.mxu0 0
  %81 = vmatpush.bf16.msra.mxu0 %v72
  %82 = vmatmul.bf16.gmra.mxu0 %v65
  %v83 = vpop.f32.mrf.mxu0
  %v84 = vadd.f32 %v36, %v83
  %v85 = vpop.f32.mrf.mxu0
  %v86 = vadd.f32 %v41, %v85
  %87 = vmatmul.bf16.gmra.mxu0 %v68
  %v88 = vpop.f32.mrf.mxu0
  %v89 = vadd.f32 %v46, %v88
  %v90 = vpop.f32.mrf.mxu0
  %v91 = vadd.f32 %v51, %v90
  %92 = vdwg.mxu0
  %v93 = vtanh.pop %v84
  %v94 = vtanh.pop %v86
  %v95 = vtanh.pop %v89
  %v96 = vtanh.pop %v91
  %v97 = vld [vmem:[%s3] sm:$0xf]
  %v98 = vld [vmem:[%s3 + $0x4] sm:$0xf]
  %v99 = vld [vmem:[%s3 + $0x8] sm:$0xf]
  %v100 = vld [vmem:[%s3 + $0xc] sm:$0xf]
  %v101 = vpack.c.bf16 %v94, %v93
  %v102 = vpack.c.bf16 %v96, %v95
  %v103 = vld [vmem:[%s4] sm:$0xff]
  %v104 = vld [vmem:[%s4 + $0x8] sm:$0xff]
  %v105 = vld [vmem:[%s4 + $0x10] sm:$0xff]
  %v106 = vld [vmem:[%s4 + $0x18] sm:$0xff]
  %108 = vset.pattern.permute.xlu0 0
  %109 = vperm.xlu0 %108, %v103
  %v110 = vpop.permute.xlu0 %109
  %113 = vset.pattern.permute.xlu0 0
  %114 = vperm.xlu0 %113, %v104
  %v115 = vpop.permute.xlu0 %114
  %118 = vset.pattern.permute.xlu0 0
  %119 = vperm.xlu0 %118, %v105
  %v120 = vpop.permute.xlu0 %119
  %123 = vset.pattern.permute.xlu0 0
  %124 = vperm.xlu0 %123, %v106
  %v125 = vpop.permute.xlu0 %124
  %v131 = vunpack.c.l.b16 %v97
  %v132 = vunpack.c.l.b16 %v98
  %v133 = vunpack.c.l.b16 %v99
  %v134 = vunpack.c.l.b16 %v100
  %v135 = vpack.c.b16 %v132, %v131
  %v136 = vpack.c.b16 %v134, %v133
  %vm137 = vcmask 261120
  %v139 = vsel %vm137, %v135, 0
  %v142 = vsel %vm137, %v136, 0
  %144 = vmatpush.bf16.msra.mxu0 0
  %145 = vmatpush.bf16.msra.mxu0 0
  %146 = vmatpush.bf16.msra.mxu0 0
  %147 = vmatpush.bf16.msra.mxu0 0
  %148 = vmatpush.bf16.msra.mxu0 0
  %149 = vmatpush.bf16.msra.mxu0 0
  %150 = vmatpush.bf16.msra.mxu0 %v102
  %151 = vmatpush.bf16.msra.mxu0 %v101
  %152 = vmatmul.bf16.gmra.mxu0 %v139
  %v153 = vpop.f32.mrf.mxu0
  %v154 = vadd.f32 %v110, %v153
  %v155 = vpop.f32.mrf.mxu0
  %v156 = vadd.f32 %v115, %v155
  %157 = vmatmul.bf16.gmra.mxu0 %v142
  %v158 = vpop.f32.mrf.mxu0
  %v159 = vadd.f32 %v120, %v158
  %v160 = vpop.f32.mrf.mxu0
  %v161 = vadd.f32 %v125, %v160
  %162 = vdwg.mxu0
  %v163 = vtanh.pop %v154
  %v164 = vtanh.pop %v156
  %v165 = vtanh.pop %v159
  %v166 = vtanh.pop %v161
  %v167 = vld [vmem:[%s5] sm:$0xff]
  %v168 = vld [vmem:[%s5 + $0x8] sm:$0xff]
  %v169 = vld [vmem:[%s5 + $0x10] sm:$0xff]
  %v170 = vld [vmem:[%s5 + $0x18] sm:$0xff]
  %172 = vset.pattern.permute.xlu0 0
  %173 = vperm.xlu0 %172, %v167
  %v174 = vpop.permute.xlu0 %173
  %177 = vset.pattern.permute.xlu0 0
  %178 = vperm.xlu0 %177, %v168
  %v179 = vpop.permute.xlu0 %178
  %182 = vset.pattern.permute.xlu0 0
  %183 = vperm.xlu0 %182, %v169
  %v184 = vpop.permute.xlu0 %183
  %187 = vset.pattern.permute.xlu0 0
  %188 = vperm.xlu0 %187, %v170
  %v189 = vpop.permute.xlu0 %188
  %v191 = vmul.f32 %v163, %v174
  %v192 = vmul.f32 %v164, %v179
  %v193 = vmul.f32 %v165, %v184
  %v194 = vmul.f32 %v166, %v189
  %v195 = vadd.f32 %v191, %v192
  %v196 = vadd.f32 %v195, %v193
  %v197 = vadd.f32 %v196, %v194
  %v198 = vrot.slane %v197, 4
  %v199 = vadd.f32 %v197, %v198
  %v200 = vrot.slane %v199, 2
  %v201 = vadd.f32 %v199, %v200
  %v202 = vrot.slane %v201, 1
  %v203 = vadd.f32 %v201, %v202
  %204 = vst [vmem:[%s6] sm:$0x1] %v203
  // Predicated region
  $region26: #{tdksnn_forward.1} parent=0 // pred_check
    _
  $region27: #{tdksnn_forward.1} parent=0 // pred_check_branch
    %206 = sbr.rel (0) target = $region29
  $region28: #{tdksnn_forward.1} parent=0 // pred_region
    _
  $region29: #{tdksnn_forward.1} parent=0 // pred_fallthru
    _
  // Predicated region
  $region30: #{tdksnn_forward.1} parent=0 // pred_check
    _
  $region31: #{tdksnn_forward.1} parent=0 // pred_check_branch
    %208 = sbr.rel (0) target = $region33
  $region32: #{tdksnn_forward.1} parent=0 // pred_region
    _
  $region33: #{tdksnn_forward.1} parent=0 // pred_fallthru
    _

</llo_original>
